<compile_context>
chip_gen: v7x
topology: tpu7x:2x2x1
jax: 0.10.0
libtpu: 0.0.40
codegen_flags: <defaults>
</compile_context>

<pallas_src>
import functools

import jax
import jax.numpy as jnp
from jax.experimental import pallas as pl
from jax.experimental.pallas import tpu as pltpu

# Coefficients from the module __init__ (deterministic constant, no checkpoint).
_GRAY_COEFFS = (65.738 / 256.0, 129.057 / 256.0, 25.064 / 256.0)


def _psnr_tile_kernel(sr_ref, hr_ref, out_ref, *,
                      pixel_range, a_coeffs, b_coeffs, shave, H, W, TH):
    """One (batch, row-tile) step: writes the tile's squared-error sum.

    sr_ref / hr_ref: (3, TH, W) VMEM blocks (batch dim squeezed).
    out_ref:         (8, 128)   VMEM block (one slot per grid step).
    """
    # gray = sum_c [ a_c * round(clip(sr_c * pr, 0, 255)) - b_c * hr_c ]
    terms = []
    for c in range(3):
        s = sr_ref[c]                                  # (TH, W)
        r = hr_ref[c]                                  # (TH, W)
        q = jnp.round(jnp.clip(s * pixel_range, 0.0, 255.0))
        terms.append(a_coeffs[c] * q - b_coeffs[c] * r)
    gray = terms[0] + terms[1] + terms[2]
    sq = gray * gray

    # Static decision: mask only when there is a crop and/or a padded row tail.
    need_row_mask = (shave > 0) or (H % TH != 0)
    need_col_mask = shave > 0
    if need_row_mask or need_col_mask:
        ok = None
        if need_row_mask:
            row0 = pl.program_id(1) * TH
            rows = row0 + jax.lax.broadcasted_iota(jnp.int32, (TH, 1), 0)
            ok = (rows >= shave) & (rows < H - shave)          # (TH, 1)
        if need_col_mask:
            cols = jax.lax.broadcasted_iota(jnp.int32, (1, W), 1)
            col_ok = (cols >= shave) & (cols < W - shave)      # (1, W)
            ok = col_ok if ok is None else (ok & col_ok)
        # jnp.where (not multiply) so garbage/NaN in padded rows cannot leak.
        sq = jnp.where(ok, sq, 0.0)

    partial = jnp.sum(sq)
    out_ref[...] = jnp.full((8, 128), partial, dtype=jnp.float32)


def _choose_tile_h(H, W):
    """Row-tile size: 2 inputs x 2 pipeline buffers x 3*TH*W*4B <= ~12 MiB,
    safe under scoped VMEM defaults on v5e (16 MiB) and v7x (32 MiB)."""
    budget_bytes = 12 * 1024 * 1024
    max_th = max(8, budget_bytes // (48 * W))
    if H <= max_th:
        return H                       # full H (block == full dim is allowed)
    th = min(max_th, 512)
    return max(8, (th // 8) * 8)       # keep sublane dim a multiple of 8


def psnr_ycbcr(sr, hr, scale, rgb_range, tile_h=None):
    """Pallas implementation of PSNR_ycbcr.forward. Returns a scalar."""
    B, C, H, W = sr.shape
    assert C == 3, "PSNR_ycbcr expects 3-channel (RGB) images"

    if scale != 1:
        shave = int(scale)             # crop by `scale`
    else:
        shave = 0                      # scale == 1: torch uses the full image
    assert H > 2 * shave and W > 2 * shave, "image too small for the crop"
    n_valid = B * (H - 2 * shave) * (W - 2 * shave)

    pixel_range = 255.0 / float(rgb_range)
    a_coeffs = tuple(c / 255.0 for c in _GRAY_COEFFS)
    b_coeffs = tuple(c / float(rgb_range) for c in _GRAY_COEFFS)

    TH = int(tile_h) if tile_h is not None else _choose_tile_h(H, W)
    assert TH == H or TH % 8 == 0
    NH = (H + TH - 1) // TH

    kernel = functools.partial(
        _psnr_tile_kernel,
        pixel_range=pixel_range,
        a_coeffs=a_coeffs,
        b_coeffs=b_coeffs,
        shave=shave,
        H=int(H),
        W=int(W),
        TH=TH,
    )

    partials = pl.pallas_call(
        kernel,
        out_shape=jax.ShapeDtypeStruct((B, NH, 8, 128), jnp.float32),
        grid_spec=pltpu.PrefetchScalarGridSpec(
            num_scalar_prefetch=0,
            grid=(B, NH),
            in_specs=[
                pl.BlockSpec((None, 3, TH, W), lambda b, h: (b, 0, h, 0)),
                pl.BlockSpec((None, 3, TH, W), lambda b, h: (b, 0, h, 0)),
            ],
            out_specs=pl.BlockSpec((None, None, 8, 128),
                                   lambda b, h: (b, h, 0, 0)),
        ),
        compiler_params=pltpu.CompilerParams(
            dimension_semantics=("parallel", "parallel"),
            vmem_limit_bytes=32 * 1024 * 1024,
        ),
    )(sr.astype(jnp.float32), hr.astype(jnp.float32))

    # Finalize in plain JAX (tiny): each grid step wrote one scalar per slot.
    total = jnp.sum(partials[:, :, 0, 0])
    mse = total / jnp.float32(n_valid)
    return -10.0 * jnp.log10(mse)


def _psnr_ycbcr_ref(sr, hr, scale, rgb_range):
    """Pure-JAX reference mirroring the torch module (for verification)."""
    pixel_range = 255.0 / rgb_range
    srq = jnp.round(jnp.clip(sr * pixel_range, 0.0, 255.0)) / pixel_range
    coeffs = jnp.array(_GRAY_COEFFS, dtype=jnp.float32).reshape(1, 3, 1, 1)
    diff = (srq - hr.astype(jnp.float32)) / rgb_range
    diff = jnp.sum(diff * coeffs, axis=1)
    if scale != 1:
        shave = scale
        valid = diff[..., shave:-shave, shave:-shave]
    else:
        valid = diff
    mse = jnp.mean(valid ** 2)
    return -10.0 * jnp.log10(mse)


if __name__ == "__main__":
    key = jax.random.PRNGKey(0)
    k1, k2 = jax.random.split(key)

    B, C, H, W = 2, 3, 16, 16
    rgb_range = 255.0

    hr = jax.random.uniform(k1, (B, C, H, W), jnp.float32) * rgb_range
    noise = jax.random.normal(k2, (B, C, H, W), jnp.float32) * 5.0
    sr = jnp.clip(hr + noise, 0.0, rgb_range)

    # Uneven-tile case: H=40 with tile_h=16 exercises the padded-row mask.
    k3, k4 = jax.random.split(k2)
    H2 = 40
    hr2 = jax.random.uniform(k3, (B, C, H2, W), jnp.float32) * rgb_range
    sr2 = jnp.clip(hr2 + jax.random.normal(k4, (B, C, H2, W), jnp.float32) * 5.0,
                   0.0, rgb_range)

    cases = [
        (sr, hr, 2, None),    # crop (shave = scale)
        (sr, hr, 1, None),    # no crop
        (sr2, hr2, 2, 16),    # multiple row tiles + padded tail
    ]
    for s_, h_, scale, th in cases:
        out = psnr_ycbcr(s_, h_, scale, rgb_range, tile_h=th)
        out = jax.block_until_ready(out)
        ref = _psnr_ycbcr_ref(s_, h_, scale, rgb_range)
        assert jnp.allclose(out, ref, rtol=1e-4, atol=1e-3), (scale, out, ref)

    print("KERNEL_OK")
</pallas_src>

<mosaic_0001>
module attributes {stable_mosaic.version = 11 : i64} {
  func.func @_psnr_tile_kernel(%arg0: i32, %arg1: i32, %arg2: memref<1x3x16x16xf32, #tpu.memory_space<vmem>>, %arg3: memref<1x3x16x16xf32, #tpu.memory_space<vmem>>, %arg4: memref<1x1x8x128xf32, #tpu.memory_space<vmem>>) attributes {dimension_semantics = [#tpu.dimension_semantics<parallel>, #tpu.dimension_semantics<parallel>], iteration_bounds = array<i64: 2, 1>, scalar_prefetch = 0 : i64, scratch_operands = 0 : i64, tpu.core_type = #tpu.core_type<tc>, window_params = [{transform_indices = @transform_0, window_bounds = array<i64: 1, 3, 16, 16>}, {transform_indices = @transform_1, window_bounds = array<i64: 1, 3, 16, 16>}, {transform_indices = @transform_2, window_bounds = array<i64: 1, 1, 8, 128>}]} {
    %c0 = arith.constant 0 : index
    %c0_0 = arith.constant 0 : index
    %c0_1 = arith.constant 0 : index
    %c0_2 = arith.constant 0 : index
    %0 = vector.load %arg2[%c0, %c0_0, %c0_1, %c0_2] : memref<1x3x16x16xf32, #tpu.memory_space<vmem>>, vector<1x1x16x16xf32>
    %1 = vector.shape_cast %0 : vector<1x1x16x16xf32> to vector<16x16xf32>
    %c0_3 = arith.constant 0 : index
    %c0_4 = arith.constant 0 : index
    %c0_5 = arith.constant 0 : index
    %c0_6 = arith.constant 0 : index
    %2 = vector.load %arg3[%c0_3, %c0_4, %c0_5, %c0_6] : memref<1x3x16x16xf32, #tpu.memory_space<vmem>>, vector<1x1x16x16xf32>
    %3 = vector.shape_cast %2 : vector<1x1x16x16xf32> to vector<16x16xf32>
    %cst = arith.constant 1.000000e+00 : f32
    %4 = vector.broadcast %cst : f32 to vector<16x16xf32>
    %5 = arith.mulf %1, %4 : vector<16x16xf32>
    %cst_7 = arith.constant 0.000000e+00 : f32
    %cst_8 = arith.constant 2.550000e+02 : f32
    %6 = vector.broadcast %cst_7 : f32 to vector<16x16xf32>
    %7 = arith.maximumf %6, %5 : vector<16x16xf32>
    %8 = vector.broadcast %cst_8 : f32 to vector<16x16xf32>
    %9 = arith.minimumf %8, %7 : vector<16x16xf32>
    %10 = math.roundeven %9 : vector<16x16xf32>
    %cst_9 = arith.constant 0.00100701593 : f32
    %11 = vector.broadcast %cst_9 : f32 to vector<16x16xf32>
    %12 = arith.mulf %11, %10 : vector<16x16xf32>
    %cst_10 = arith.constant 0.00100701593 : f32
    %13 = vector.broadcast %cst_10 : f32 to vector<16x16xf32>
    %14 = arith.mulf %13, %3 : vector<16x16xf32>
    %15 = arith.subf %12, %14 : vector<16x16xf32>
    %c0_11 = arith.constant 0 : index
    %c1 = arith.constant 1 : index
    %c0_12 = arith.constant 0 : index
    %c0_13 = arith.constant 0 : index
    %16 = vector.load %arg2[%c0_11, %c1, %c0_12, %c0_13] : memref<1x3x16x16xf32, #tpu.memory_space<vmem>>, vector<1x1x16x16xf32>
    %17 = vector.shape_cast %16 : vector<1x1x16x16xf32> to vector<16x16xf32>
    %c0_14 = arith.constant 0 : index
    %c1_15 = arith.constant 1 : index
    %c0_16 = arith.constant 0 : index
    %c0_17 = arith.constant 0 : index
    %18 = vector.load %arg3[%c0_14, %c1_15, %c0_16, %c0_17] : memref<1x3x16x16xf32, #tpu.memory_space<vmem>>, vector<1x1x16x16xf32>
    %19 = vector.shape_cast %18 : vector<1x1x16x16xf32> to vector<16x16xf32>
    %cst_18 = arith.constant 1.000000e+00 : f32
    %20 = vector.broadcast %cst_18 : f32 to vector<16x16xf32>
    %21 = arith.mulf %17, %20 : vector<16x16xf32>
    %cst_19 = arith.constant 0.000000e+00 : f32
    %cst_20 = arith.constant 2.550000e+02 : f32
    %22 = vector.broadcast %cst_19 : f32 to vector<16x16xf32>
    %23 = arith.maximumf %22, %21 : vector<16x16xf32>
    %24 = vector.broadcast %cst_20 : f32 to vector<16x16xf32>
    %25 = arith.minimumf %24, %23 : vector<16x16xf32>
    %26 = math.roundeven %25 : vector<16x16xf32>
    %cst_21 = arith.constant 0.00197697617 : f32
    %27 = vector.broadcast %cst_21 : f32 to vector<16x16xf32>
    %28 = arith.mulf %27, %26 : vector<16x16xf32>
    %cst_22 = arith.constant 0.00197697617 : f32
    %29 = vector.broadcast %cst_22 : f32 to vector<16x16xf32>
    %30 = arith.mulf %29, %19 : vector<16x16xf32>
    %31 = arith.subf %28, %30 : vector<16x16xf32>
    %c0_23 = arith.constant 0 : index
    %c2 = arith.constant 2 : index
    %c0_24 = arith.constant 0 : index
    %c0_25 = arith.constant 0 : index
    %32 = vector.load %arg2[%c0_23, %c2, %c0_24, %c0_25] : memref<1x3x16x16xf32, #tpu.memory_space<vmem>>, vector<1x1x16x16xf32>
    %33 = vector.shape_cast %32 : vector<1x1x16x16xf32> to vector<16x16xf32>
    %c0_26 = arith.constant 0 : index
    %c2_27 = arith.constant 2 : index
    %c0_28 = arith.constant 0 : index
    %c0_29 = arith.constant 0 : index
    %34 = vector.load %arg3[%c0_26, %c2_27, %c0_28, %c0_29] : memref<1x3x16x16xf32, #tpu.memory_space<vmem>>, vector<1x1x16x16xf32>
    %35 = vector.shape_cast %34 : vector<1x1x16x16xf32> to vector<16x16xf32>
    %cst_30 = arith.constant 1.000000e+00 : f32
    %36 = vector.broadcast %cst_30 : f32 to vector<16x16xf32>
    %37 = arith.mulf %33, %36 : vector<16x16xf32>
    %cst_31 = arith.constant 0.000000e+00 : f32
    %cst_32 = arith.constant 2.550000e+02 : f32
    %38 = vector.broadcast %cst_31 : f32 to vector<16x16xf32>
    %39 = arith.maximumf %38, %37 : vector<16x16xf32>
    %40 = vector.broadcast %cst_32 : f32 to vector<16x16xf32>
    %41 = arith.minimumf %40, %39 : vector<16x16xf32>
    %42 = math.roundeven %41 : vector<16x16xf32>
    %cst_33 = arith.constant 3.83946084E-4 : f32
    %43 = vector.broadcast %cst_33 : f32 to vector<16x16xf32>
    %44 = arith.mulf %43, %42 : vector<16x16xf32>
    %cst_34 = arith.constant 3.83946084E-4 : f32
    %45 = vector.broadcast %cst_34 : f32 to vector<16x16xf32>
    %46 = arith.mulf %45, %35 : vector<16x16xf32>
    %47 = arith.subf %44, %46 : vector<16x16xf32>
    %48 = arith.addf %15, %31 : vector<16x16xf32>
    %49 = arith.addf %48, %47 : vector<16x16xf32>
    %50 = arith.mulf %49, %49 : vector<16x16xf32>
    %c16_i32 = arith.constant 16 : i32
    %51 = arith.muli %arg1, %c16_i32 : i32
    %52 = tpu.iota {dimensions = array<i32: 0>} : vector<16x1xi32>
    %53 = vector.broadcast %51 : i32 to vector<16x1xi32>
    %54 = arith.addi %53, %52 : vector<16x1xi32>
    %c2_i32 = arith.constant 2 : i32
    %55 = vector.broadcast %c2_i32 : i32 to vector<16x1xi32>
    %56 = arith.cmpi sge, %54, %55 : vector<16x1xi32>
    %c14_i32 = arith.constant 14 : i32
    %57 = vector.broadcast %c14_i32 : i32 to vector<16x1xi32>
    %58 = arith.cmpi slt, %54, %57 : vector<16x1xi32>
    %59 = arith.andi %56, %58 : vector<16x1xi1>
    %60 = tpu.iota {dimensions = array<i32: 1>} : vector<1x16xi32>
    %c2_i32_35 = arith.constant 2 : i32
    %61 = vector.broadcast %c2_i32_35 : i32 to vector<1x16xi32>
    %62 = arith.cmpi sge, %60, %61 : vector<1x16xi32>
    %c14_i32_36 = arith.constant 14 : i32
    %63 = vector.broadcast %c14_i32_36 : i32 to vector<1x16xi32>
    %64 = arith.cmpi slt, %60, %63 : vector<1x16xi32>
    %65 = arith.andi %62, %64 : vector<1x16xi1>
    %66 = vector.broadcast %59 : vector<16x1xi1> to vector<16x16xi1>
    %67 = vector.broadcast %65 : vector<1x16xi1> to vector<16x16xi1>
    %68 = arith.andi %66, %67 : vector<16x16xi1>
    %cst_37 = arith.constant 0.000000e+00 : f32
    %69 = vector.broadcast %cst_37 : f32 to vector<16x16xf32>
    %70 = arith.select %68, %50, %69 : vector<16x16xi1>, vector<16x16xf32>
    %71 = vector.shape_cast %70 : vector<16x16xf32> to vector<1x16x16xf32>
    %cst_38 = arith.constant dense<0.000000e+00> : vector<1xf32>
    %72 = vector.multi_reduction <add>, %71, %cst_38 [1, 2] : vector<1x16x16xf32> to vector<1xf32>
    %73 = vector.shape_cast %72 : vector<1xf32> to vector<1x1x1xf32>
    %74 = vector.extract %73[0, 0, 0] : f32 from vector<1x1x1xf32>
    %75 = vector.broadcast %74 : f32 to vector<8x128xf32>
    %c0_39 = arith.constant 0 : index
    %c0_40 = arith.constant 0 : index
    %c0_41 = arith.constant 0 : index
    %c0_42 = arith.constant 0 : index
    %76 = vector.load %arg4[%c0_39, %c0_40, %c0_41, %c0_42] : memref<1x1x8x128xf32, #tpu.memory_space<vmem>>, vector<1x1x8x128xf32>
    %77 = vector.shape_cast %76 : vector<1x1x8x128xf32> to vector<8x128xf32>
    %78 = vector.shape_cast %75 : vector<8x128xf32> to vector<1x1x8x128xf32>
    tpu.vector_store %arg4[%c0_39, %c0_40, %c0_41, %c0_42], %78 {strides = array<i32>} : memref<1x1x8x128xf32, #tpu.memory_space<vmem>>, vector<1x1x8x128xf32>,
    return
  }
  func.func @transform_0(%arg0: i32, %arg1: i32) -> (i32, i32, i32, i32) {
    %c0_i32 = arith.constant 0 : i32
    %c0_i32_0 = arith.constant 0 : i32
    %c0_i32_1 = arith.constant 0 : i32
    return %arg0, %c0_i32, %arg1, %c0_i32_0 : i32, i32, i32, i32
  }
  func.func @transform_1(%arg0: i32, %arg1: i32) -> (i32, i32, i32, i32) {
    %c0_i32 = arith.constant 0 : i32
    %c0_i32_0 = arith.constant 0 : i32
    %c0_i32_1 = arith.constant 0 : i32
    return %arg0, %c0_i32, %arg1, %c0_i32_0 : i32, i32, i32, i32
  }
  func.func @transform_2(%arg0: i32, %arg1: i32) -> (i32, i32, i32, i32) {
    %c0_i32 = arith.constant 0 : i32
    %c0_i32_0 = arith.constant 0 : i32
    %c0_i32_1 = arith.constant 0 : i32
    return %arg0, %arg1, %c0_i32, %c0_i32_0 : i32, i32, i32, i32
  }
}

</mosaic_0001>

<llo_original>
// kernel: tpu_custom_call.1
$region0: #{tpu_custom_call.1}
  #allocation0 [shape = 'u32[]', space=smem, size = 0x4, offset = 0x4, fixed_abs, tag = 'smem constant byte address 0x4 - core index']
  #allocation1 [shape = 'u32[144,128]{1,0:T(1,128)}', space=vmem, size = 0x12000, scoped, tag = 'internal scratch']
  %s0 = inlined_call_operand.hbm [shape: f32[2,3,16,16], index: 0, kind: input, shape index: {}]
  %s1 = inlined_call_operand.hbm [shape: f32[2,3,16,16], index: 1, kind: input, shape index: {}]
  %s2 = inlined_call_operand.hbm [shape: f32[2,1,8,128], index: 2, kind: output, shape index: {}]
  %s3 = sld [smem:[#allocation0]]
  $region49: #{tpu_custom_call.1} parent=0
    _
  %s5 = ssub.s32 1, %s3
  %s6 = scalar_select 0, %s5, %s3
  $region1: #{tpu_custom_call.1} parent=0
    #allocation2 [shape = 'u8[49152]{0}', space=vmem, size = 0xc000, scoped, tag = 'input window, operand 0']
    #allocation3 [shape = 's32[2]{0}', space=sflag, size = 0x8, scoped, tag = 'scoped memory for tpu_custom_call.1']
    #allocation4 [shape = 's32[2]{0}', space=sflag, size = 0x8, scoped, tag = 'scoped memory for tpu_custom_call.1']
    #allocation5 [shape = 'u8[49152]{0}', space=vmem, size = 0xc000, scoped, tag = 'input window, operand 1']
    #allocation6 [shape = 's32[2]{0}', space=sflag, size = 0x8, scoped, tag = 'scoped memory for tpu_custom_call.1']
    #allocation7 [shape = 'u8[8192]{0}', space=vmem, size = 0x2000, scoped, tag = 'output window, operand 0']
    %7 = vsyncpa [#allocation3], 0
    %s8 = scalar_lea.sflag [#allocation3], 1
    %9 = vsyncpa %s8, 0
    %10 = vsyncpa [#allocation6], 0
    %s11 = scalar_lea.sflag [#allocation6], 1
    %12 = vsyncpa %s11, 0
    %13 = vsyncpa [#allocation4], 0
    %s14 = scalar_lea.sflag [#allocation4], 1
    %15 = vsyncpa %s14, 0
    loop: start=0, step=1, limit=4
    $region2: #{tpu_custom_call.1} parent=1 // loop_pre_header
      _
    $region3: #{tpu_custom_call.1} parent=1 // loop_header
      %s17 = sphi 0, %s21
      %p18 = scmp.ge.s32.totalorder %s17, 4
      %s24 = sphi 0, %s36
      %s25 = sphi 0, %s32
      %s26 = sphi 0, %s24
      %s27 = sphi 0, %s25
      %s28 = sphi 0, %s26
      %s29 = sphi 0, %s27
      %s41 = sphi 0, %s43
      %s44 = sphi 0, %s41
      %s45 = sphi 0, %s44
      %s61 = sphi 0, %s45
      %s69 = sphi 0, %s71
      %s72 = sphi 0, %s69
      %s73 = sphi 0, %s72
      %s89 = sphi 0, %s73
      %s97 = sphi 0, %s99
      %s100 = sphi 0, %s97
      %s101 = sphi 0, %s100
      %s117 = sphi 0, %s101
    $region4: #{tpu_custom_call.1} parent=1 // loop_header_branch
      %20 = sbr.rel (%p18) target = $region8
    $region5: #{tpu_custom_call.1} parent=1 // loop_body
      %s22 = ssub.s32 %s17, 1
      %s23 = ssub.s32 %s17, 2
      %s30 = sadd.s32 1, %s25
      %p31 = scmp.ge.s32.totalorder %s30, 1
      %s32 = scalar_select %p31, 0, %s30
      %s33 = sadd.s32 1, %s24
      %s34 = scalar_select %p31, %s33, %s24
      %p35 = scmp.ge.s32.totalorder %s34, 2
      %s36 = scalar_select %p35, 0, %s34
      %s37 = ssub.s32 %s24, %s36
      %s38 = ssub.s32 %s25, %s32
      %s39 = sor.u32 %s37, %s38
      %p40 = scmp.eq.s32.totalorder %s39, 0
      %s42 = sadd.s32 %s41, 1
      %s43 = scalar_select %p40, %s41, %s42
      %p46 = pneg %p40
      %p47 = scmp.eq.s32.totalorder %s17, 1
      %p48 = por %p46, %p47
      %p49 = scmp.ne.s32.totalorder %s41, %s44
      %p50 = scmp.eq.s32.totalorder %s17, 0
      %p51 = por %p49, %p50
      %p52 = scmp.ne.s32.totalorder %s41, %s44
      %p53 = scmp.eq.s32.totalorder %s22, 1
      %p54 = por %p52, %p53
      %p55 = scmp.ne.s32.totalorder %s44, %s45
      %p56 = scmp.eq.s32.totalorder %s22, 0
      %p57 = por %p55, %p56
      %p58 = scmp.ne.s32.totalorder %s44, %s45
      %p59 = scmp.eq.s32.totalorder %s23, 1
      %p60 = por %p58, %p59
      %p62 = scmp.ne.s32.totalorder %s45, %s61
      %p63 = scmp.eq.s32.totalorder %s23, 0
      %p64 = por %p62, %p63
      %s65 = ssub.s32 %s24, %s36
      %s66 = ssub.s32 %s25, %s32
      %s67 = sor.u32 %s65, %s66
      %p68 = scmp.eq.s32.totalorder %s67, 0
      %s70 = sadd.s32 %s69, 1
      %s71 = scalar_select %p68, %s69, %s70
      %p74 = pneg %p68
      %p75 = scmp.eq.s32.totalorder %s17, 1
      %p76 = por %p74, %p75
      %p77 = scmp.ne.s32.totalorder %s69, %s72
      %p78 = scmp.eq.s32.totalorder %s17, 0
      %p79 = por %p77, %p78
      %p80 = scmp.ne.s32.totalorder %s69, %s72
      %p81 = scmp.eq.s32.totalorder %s22, 1
      %p82 = por %p80, %p81
      %p83 = scmp.ne.s32.totalorder %s72, %s73
      %p84 = scmp.eq.s32.totalorder %s22, 0
      %p85 = por %p83, %p84
      %p86 = scmp.ne.s32.totalorder %s72, %s73
      %p87 = scmp.eq.s32.totalorder %s23, 1
      %p88 = por %p86, %p87
      %p90 = scmp.ne.s32.totalorder %s73, %s89
      %p91 = scmp.eq.s32.totalorder %s23, 0
      %p92 = por %p90, %p91
      %s93 = ssub.s32 %s24, %s36
      %s94 = ssub.s32 %s25, %s32
      %s95 = sor.u32 %s93, %s94
      %p96 = scmp.eq.s32.totalorder %s95, 0
      %s98 = sadd.s32 %s97, 1
      %s99 = scalar_select %p96, %s97, %s98
      %p102 = pneg %p96
      %p103 = scmp.eq.s32.totalorder %s17, 1
      %p104 = por %p102, %p103
      %p105 = scmp.ne.s32.totalorder %s97, %s100
      %p106 = scmp.eq.s32.totalorder %s17, 0
      %p107 = por %p105, %p106
      %p108 = scmp.ne.s32.totalorder %s97, %s100
      %p109 = scmp.eq.s32.totalorder %s22, 1
      %p110 = por %p108, %p109
      %p111 = scmp.ne.s32.totalorder %s100, %s101
      %p112 = scmp.eq.s32.totalorder %s22, 0
      %p113 = por %p111, %p112
      %p114 = scmp.ne.s32.totalorder %s100, %s101
      %p115 = scmp.eq.s32.totalorder %s23, 1
      %p116 = por %p114, %p115
      %p118 = scmp.ne.s32.totalorder %s101, %s117
      %p119 = scmp.eq.s32.totalorder %s23, 0
      %p120 = por %p118, %p119
      %p121 = scmp.le.s32.totalorder 1, %s17
      %p122 = scmp.lt.s32.totalorder %s17, 3
      %p123 = pnand %p121, %p122
      %p124 = pneg %p123
      // Predicated region
      $region9: #{tpu_custom_call.1} parent=5 // pred_check
        _
      $region10: #{tpu_custom_call.1} parent=5 // pred_check_branch
        %126 = sbr.rel (%p123) target = $region12
      $region11: #{tpu_custom_call.1} parent=5 // pred_region
        %s127 = ssub.s32 %s17, 1
      $region12: #{tpu_custom_call.1} parent=5 // pred_fallthru
        _
      %p128 = scmp.lt.s32.totalorder %s17, 2
      // Predicated region
      $region13: #{tpu_custom_call.1} parent=5 // pred_check
        %p129 = pneg %p128
      $region14: #{tpu_custom_call.1} parent=5 // pred_check_branch
        %131 = sbr.rel (%p129) target = $region16
      $region15: #{tpu_custom_call.1} parent=5 // pred_region
        // Predicated region
        $region17: #{tpu_custom_call.1} parent=15 // pred_check
          %p132 = pneg %p51
        $region18: #{tpu_custom_call.1} parent=15 // pred_check_branch
          %134 = sbr.rel (%p132) target = $region20
        $region19: #{tpu_custom_call.1} parent=15 // pred_region
          %s135 = sand.u32 %s41, 1
          %s136 = scalar_lea.sflag [#allocation3], %s135
          %s137 = sand.u32 %s41, 1
          %s138 = smul.addr %s137, 48
          %s139 = scalar_lea.vmem [#allocation2], %s138
          %s140 = smul.u32 2, %s25
          %s142 = ssub.s32 768, 768
          %143 = vsyncadd %s136, %s142
          %s144 = smul.addr %s24, 6
          %s145 = sadd.s32 %s140, %s144
          %s146 = smul.addr %s145, 128
          %s147 = scalar_lea.hbm %s0, %s146
          %s148 = sshll.u32 %s139, 4
          %s149 = int_to_ptr.vmem [resolvable:$true] %s148
          %154 = dma.hbm_to_vmem [thread:$0]  %s147, 768, %s149, %s136, 128, 128, 8
        $region20: #{tpu_custom_call.1} parent=15 // pred_fallthru
          _
        // Predicated region
        $region21: #{tpu_custom_call.1} parent=15 // pred_check
          %p155 = pneg %p79
        $region22: #{tpu_custom_call.1} parent=15 // pred_check_branch
          %157 = sbr.rel (%p155) target = $region24
        $region23: #{tpu_custom_call.1} parent=15 // pred_region
          %s158 = sand.u32 %s69, 1
          %s159 = scalar_lea.sflag [#allocation6], %s158
          %s160 = sand.u32 %s69, 1
          %s161 = smul.addr %s160, 48
          %s162 = scalar_lea.vmem [#allocation5], %s161
          %s163 = smul.u32 2, %s25
          %s165 = ssub.s32 768, 768
          %166 = vsyncadd %s159, %s165
          %s167 = smul.addr %s24, 6
          %s168 = sadd.s32 %s163, %s167
          %s169 = smul.addr %s168, 128
          %s170 = scalar_lea.hbm %s1, %s169
          %s171 = sshll.u32 %s162, 4
          %s172 = int_to_ptr.vmem [resolvable:$true] %s171
          %177 = dma.hbm_to_vmem [thread:$0]  %s170, 768, %s172, %s159, 128, 128, 8
        $region24: #{tpu_custom_call.1} parent=15 // pred_fallthru
          _
      $region16: #{tpu_custom_call.1} parent=5 // pred_fallthru
        _
      %p178 = scmp.le.s32.totalorder 1, %s17
      %p179 = scmp.lt.s32.totalorder %s17, 3
      %p180 = pnand %p178, %p179
      %p181 = pneg %p180
      // Predicated region
      $region25: #{tpu_custom_call.1} parent=5 // pred_check
        _
      $region26: #{tpu_custom_call.1} parent=5 // pred_check_branch
        %183 = sbr.rel (%p180) target = $region28
      $region27: #{tpu_custom_call.1} parent=5 // pred_region
        %s184 = ssub.s32 %s17, 1
        %s185 = sand.u32 %s44, 1
        %s186 = scalar_lea.sflag [#allocation3], %s185
        %s187 = sand.u32 %s44, 1
        %s188 = smul.addr %s187, 48
        %s189 = scalar_lea.vmem [#allocation2], %s188
        // Predicated region
        $region29: #{tpu_custom_call.1} parent=27 // pred_check
          %p190 = pneg %p57
        $region30: #{tpu_custom_call.1} parent=27 // pred_check_branch
          %192 = sbr.rel (%p190) target = $region32
        $region31: #{tpu_custom_call.1} parent=27 // pred_region
          %193 = dma.done %s186, 768
        $region32: #{tpu_custom_call.1} parent=27 // pred_fallthru
          _
        %s194 = sand.u32 %s72, 1
        %s195 = scalar_lea.sflag [#allocation6], %s194
        %s196 = sand.u32 %s72, 1
        %s197 = smul.addr %s196, 48
        %s198 = scalar_lea.vmem [#allocation5], %s197
        // Predicated region
        $region33: #{tpu_custom_call.1} parent=27 // pred_check
          %p199 = pneg %p85
        $region34: #{tpu_custom_call.1} parent=27 // pred_check_branch
          %201 = sbr.rel (%p199) target = $region36
        $region35: #{tpu_custom_call.1} parent=27 // pred_region
          %202 = dma.done %s195, 768
        $region36: #{tpu_custom_call.1} parent=27 // pred_fallthru
          _
        %s203 = sand.u32 %s44, 1
        %s204 = scalar_lea.sflag [#allocation3], %s203
        %s205 = sand.u32 %s44, 1
        %s206 = smul.addr %s205, 48
        %s207 = scalar_lea.vmem [#allocation2], %s206
        %p208 = pneg %p57
        %p209 = pneg %p54
        %s210 = sand.u32 %s72, 1
        %s211 = scalar_lea.sflag [#allocation6], %s210
        %s212 = sand.u32 %s72, 1
        %s213 = smul.addr %s212, 48
        %s214 = scalar_lea.vmem [#allocation5], %s213
        %p215 = pneg %p85
        %p216 = pneg %p82
        %p217 = pneg %p113
        %p218 = pneg %p110
        %s219 = sand.u32 %s100, 1
        %s220 = scalar_lea.sflag [#allocation4], %s219
        %s221 = sand.u32 %s100, 1
        %s222 = smul.addr %s221, 8
        %s223 = scalar_lea.vmem [#allocation7], %s222
        %s224 = smul.u32 2, %s27
        %s225 = smul.u32 2, %s27
        %v226 = vld [vmem:[%s189] sm:$0xff]
        %v227 = vld [vmem:[%s189 + $0x8] sm:$0xff]
        %v228 = vld [vmem:[%s198] sm:$0xff]
        %v229 = vld [vmem:[%s198 + $0x8] sm:$0xff]
        %v230 = vmax.f32 %v226, 0.0
        %v231 = vmax.f32 %v227, 0.0
        %v232 = vmin.f32 %v230, 255.0
        %v233 = vmin.f32 %v231, 255.0
        %v234 = vround.ne.pseudo %v232
        %v235 = vround.ne.pseudo %v233
        %v236 = vmul.f32 %v234, 0.0010070159
        %v237 = vmul.f32 %v235, 0.0010070159
        %v238 = vmul.f32 %v228, 0.0010070159
        %v239 = vmul.f32 %v229, 0.0010070159
        %v240 = vsub.f32 %v236, %v238
        %v241 = vsub.f32 %v237, %v239
        %s242 = scalar_lea.vmem %s189, 16 [#allocation2]
        %v243 = vld [vmem:[%s242] sm:$0xff]
        %v244 = vld [vmem:[%s242 + $0x8] sm:$0xff]
        %s245 = scalar_lea.vmem %s198, 16 [#allocation5]
        %v246 = vld [vmem:[%s245] sm:$0xff]
        %v247 = vld [vmem:[%s245 + $0x8] sm:$0xff]
        %v248 = vmax.f32 %v243, 0.0
        %v249 = vmax.f32 %v244, 0.0
        %v250 = vmin.f32 %v248, 255.0
        %v251 = vmin.f32 %v249, 255.0
        %v252 = vround.ne.pseudo %v250
        %v253 = vround.ne.pseudo %v251
        %v254 = vmul.f32 %v252, 0.0019769762
        %v255 = vmul.f32 %v253, 0.0019769762
        %v256 = vmul.f32 %v246, 0.0019769762
        %v257 = vmul.f32 %v247, 0.0019769762
        %v258 = vsub.f32 %v254, %v256
        %v259 = vsub.f32 %v255, %v257
        %s260 = scalar_lea.vmem %s189, 32 [#allocation2]
        %v261 = vld [vmem:[%s260] sm:$0xff]
        %v262 = vld [vmem:[%s260 + $0x8] sm:$0xff]
        %s263 = scalar_lea.vmem %s198, 32 [#allocation5]
        %v264 = vld [vmem:[%s263] sm:$0xff]
        %v265 = vld [vmem:[%s263 + $0x8] sm:$0xff]
        %v266 = vmax.f32 %v261, 0.0
        %v267 = vmax.f32 %v262, 0.0
        %v268 = vmin.f32 %v266, 255.0
        %v269 = vmin.f32 %v267, 255.0
        %v270 = vround.ne.pseudo %v268
        %v271 = vround.ne.pseudo %v269
        %v272 = vmul.f32 %v270, 0.00038394608
        %v273 = vmul.f32 %v271, 0.00038394608
        %v274 = vmul.f32 %v264, 0.00038394608
        %v275 = vmul.f32 %v265, 0.00038394608
        %v276 = vsub.f32 %v272, %v274
        %v277 = vsub.f32 %v273, %v275
        %v278 = vadd.f32 %v240, %v258
        %v279 = vadd.f32 %v241, %v259
        %v280 = vadd.f32 %v278, %v276
        %v281 = vadd.f32 %v279, %v277
        %v282 = vmul.f32 %v280, %v280
        %v283 = vmul.f32 %v281, %v281
        %s284 = smul.u32 %s27, 16
        %v285 = vlaneseq
        %v286 = vshrl.u32 %v285, 7
        %v287 = vadd.s32 %v286, 8
        %v288 = vstv %s284
        %v289 = vadd.s32 %v288, %v286
        %v290 = vadd.s32 %v288, %v287
        %vm291 = vcmp.ge.s32.totalorder %v289, 2
        %vm292 = vcmp.ge.s32.totalorder %v290, 2
        %vm293 = vcmp.lt.s32.totalorder %v289, 14
        %vm294 = vcmp.lt.s32.totalorder %v290, 14
        %vm295 = vmand %vm291, %vm293
        %vm296 = vmand %vm292, %vm294
        %v297 = vlaneseq
        %v298 = vand.u32 %v297, 127
        %vm299 = vcmp.ge.s32.totalorder %v298, 2
        %vm300 = vcmp.lt.s32.totalorder %v298, 14
        %vm301 = vmand %vm299, %vm300
        %v302 = vsel %vm295, 1, 0
        %v303 = vsel %vm296, 1, 0
        %vm304 = vcmp.eq.s32.totalorder %v302, 1
        %vm305 = vcmp.eq.s32.totalorder %v303, 1
        %v306 = vsel %vm301, 1, 0
        %vm307 = vcmp.eq.s32.totalorder %v306, 1
        %vm308 = vmand %vm304, %vm307
        %vm309 = vmand %vm305, %vm307
        %v310 = vsel %vm308, %v282, 0.0
        %v311 = vsel %vm309, %v283, 0.0
        %vm312 = vcmask 130048
        %v313 = vsel %vm312, %v310, 0.0
        %v314 = vsel %vm312, %v311, 0.0
        %v315 = vadd.f32 %v313, %v314
        %316 = vadd.xlane.f32.xlu0 %v315
        %v317 = vpop.xlane.xlu0 %316
        %v318 = vrot.slane %v317, 4
        %v319 = vadd.f32 %v317, %v318
        %v320 = vrot.slane %v319, 2
        %v321 = vadd.f32 %v319, %v320
        %v322 = vrot.slane %v321, 1
        %v323 = vadd.f32 %v321, %v322
        %s324 = vtos %v323
        %v325 = vstv %s324
        %326 = vst [vmem:[%s223] sm:$0xff] %v325
        %s327 = sand.u32 %s100, 1
        %s328 = scalar_lea.sflag [#allocation4], %s327
        %s329 = sand.u32 %s100, 1
        %s330 = smul.addr %s329, 8
        %s331 = scalar_lea.vmem [#allocation7], %s330
        // Predicated region
        $region37: #{tpu_custom_call.1} parent=27 // pred_check
          %p332 = pneg %p110
        $region38: #{tpu_custom_call.1} parent=27 // pred_check_branch
          %334 = sbr.rel (%p332) target = $region40
        $region39: #{tpu_custom_call.1} parent=27 // pred_region
          %s336 = ssub.s32 128, 128
          %337 = vsyncadd %s328, %s336
          %s338 = sadd.s32 %s27, %s26
          %s339 = smul.addr %s338, 128
          %s340 = scalar_lea.hbm %s2, %s339
          %s342 = sshll.u32 %s331, 4
          %s343 = int_to_ptr.vmem [resolvable:$true] %s342
          %345 = dma.vmem_to_hbm [thread:$0]  %s343, 128, %s340, %s328
        $region40: #{tpu_custom_call.1} parent=27 // pred_fallthru
          _
      $region28: #{tpu_custom_call.1} parent=5 // pred_fallthru
        _
      %p346 = scmp.le.s32.totalorder 2, %s17
      // Predicated region
      $region41: #{tpu_custom_call.1} parent=5 // pred_check
        %p347 = pneg %p346
      $region42: #{tpu_custom_call.1} parent=5 // pred_check_branch
        %349 = sbr.rel (%p347) target = $region44
      $region43: #{tpu_custom_call.1} parent=5 // pred_region
        %s350 = ssub.s32 %s17, 2
        // Predicated region
        $region45: #{tpu_custom_call.1} parent=43 // pred_check
          %p351 = pneg %p116
        $region46: #{tpu_custom_call.1} parent=43 // pred_check_branch
          %353 = sbr.rel (%p351) target = $region48
        $region47: #{tpu_custom_call.1} parent=43 // pred_region
          %s354 = sand.u32 %s101, 1
          %s355 = scalar_lea.sflag [#allocation4], %s354
          %s356 = sand.u32 %s101, 1
          %s357 = smul.addr %s356, 8
          %s358 = scalar_lea.vmem [#allocation7], %s357
          %359 = dma.done %s355, 128
        $region48: #{tpu_custom_call.1} parent=43 // pred_fallthru
          _
      $region44: #{tpu_custom_call.1} parent=5 // pred_fallthru
        _
    $region6: #{tpu_custom_call.1} parent=1 // loop_footer
      %s21 = sadd.s32 1, %s17
    $region7: #{tpu_custom_call.1} parent=1 // loop_footer_branch
      %16 = sbr.rel target = $region3
    $region8: #{tpu_custom_call.1} parent=1 // loop_exit
      _
    %360 = vsyncpa [#allocation3], 1
    %s361 = scalar_lea.sflag [#allocation3], 1
    %362 = vsyncpa %s361, 1
    %363 = vsyncpa [#allocation6], 1
    %s364 = scalar_lea.sflag [#allocation6], 1
    %365 = vsyncpa %s364, 1
    %366 = vsyncpa [#allocation4], 1
    %s367 = scalar_lea.sflag [#allocation4], 1
    %368 = vsyncpa %s367, 1

</llo_original>
